<compile_context>
chip_gen: v7x
topology: tpu7x:2x2x1
jax: 0.10.0
libtpu: 0.0.40
codegen_flags: <defaults>
</compile_context>

<pallas_src>
import functools

import jax
import jax.numpy as jnp
from jax.experimental import pallas as pl
from jax.experimental.pallas import tpu as pltpu


def _round_up(n, m):
    return ((n + m - 1) // m) * m


def _largest_divisor_leq(n, cap):
    for d in range(min(n, cap), 0, -1):
        if n % d == 0:
            return d
    return 1


def _rnn_kernel(xw_ref, h0_ref, wh_hbm, out_ref, hT_ref,
                wh_vmem, h_scratch, *, block_t, nonlinearity):
    """One grid step = `block_t` timesteps of the recurrence for one batch block.

    xw_ref : (block_t, block_b, Hp)  precomputed x@Wx.T + (bx+bh), time-major
    h0_ref : (block_b, Hp)           initial hidden state for this batch block
    wh_hbm : (Hp, Hp)                Wh.T, raw HBM ref (memory_space=pl.ANY)
    out_ref: (block_t, block_b, Hp)  pre-activation outputs
    hT_ref : (block_b, Hp)           final (post-nonlinearity) hidden state
    """
    t = pl.program_id(1)

    # Start of this batch block's time loop: single-buffer Wh.T into VMEM and
    # (re)initialize the carried hidden state from h0.
    @pl.when(t == 0)
    def _():
        pltpu.sync_copy(wh_hbm, wh_vmem)
        h_scratch[...] = h0_ref[...].astype(jnp.float32)

    wh = wh_vmem[...]                       # (Hp, Hp), native weight dtype
    h = h_scratch[...]                      # (block_b, Hp), f32 carry

    # Statically unrolled inner time loop (block_t is a Python int).
    for s in range(block_t):
        pre = xw_ref[s].astype(jnp.float32) + jnp.dot(
            h.astype(wh.dtype), wh, preferred_element_type=jnp.float32)
        out_ref[s] = pre.astype(out_ref.dtype)            # PRE-activation output
        if nonlinearity == "tanh":
            h = jnp.tanh(pre)
        else:
            h = jnp.maximum(pre, 0.0)

    h_scratch[...] = h

    @pl.when(t == pl.num_programs(1) - 1)
    def _():
        hT_ref[...] = h.astype(hT_ref.dtype)


def vanilla_rnn_pallas(x, h0, wx, wh, bx, bh, *, nonlinearity="tanh",
                       max_block_t=8, block_b=None):
    """x: (B, T, I); h0: (B, H); wx: (H, I); wh: (H, H); bx, bh: (H,).

    Returns (output (B, T, H) pre-activations, h_final (B, H) post-nonlinearity)."""
    assert nonlinearity in ("tanh", "relu")
    B, T, I = x.shape
    H = wh.shape[0]

    # --- Hoisted input projection: one big MXU-friendly matmul, biases folded in, and the
    #     (B,T,I)->(T,B,H) permutation fused into the same einsum (no extra transpose pass).
    xw = (jnp.einsum("bti,hi->tbh", x, wx, preferred_element_type=jnp.float32)
          + (bx + bh).astype(jnp.float32)).astype(x.dtype)

    # --- Pad to TPU-native tiles: batch -> multiple of 8 sublanes, hidden -> 128 lanes.
    #     Zero padding is self-consistent (stays zero through the recurrence).
    Bp = _round_up(B, 8)
    Hp = _round_up(H, 128)
    xw_p = jnp.pad(xw, ((0, 0), (0, Bp - B), (0, Hp - H)))
    h0_p = jnp.pad(h0, ((0, Bp - B), (0, Hp - H)))
    whT_p = jnp.pad(wh.T, ((0, Hp - H), (0, Hp - H)))      # (Hp, Hp): pre += h @ Wh.T

    # --- Tiling: chunk the time axis; split batch into >=2 blocks when possible so the
    #     "parallel" batch grid axis can be sharded across TensorCores (v7x megacore).
    block_t = _largest_divisor_leq(T, max_block_t)
    if block_b is None:
        block_b = Bp // 2 if Bp % 16 == 0 else Bp
    assert Bp % block_b == 0 and block_b % 8 == 0
    nb, nt = Bp // block_b, T // block_t

    # --- Explicit VMEM budget (xw/out double-buffered by the pipeline, Wh single-buffered).
    in_item = jnp.dtype(x.dtype).itemsize
    vmem_est = (4 * block_t * block_b * Hp * in_item                 # xw + out (x2 buffers)
                + 2 * block_b * Hp * in_item                         # h0 blocks
                + Hp * Hp * jnp.dtype(whT_p.dtype).itemsize          # Wh.T scratch
                + block_b * Hp * 4)                                  # f32 hidden carry
    vmem_limit = int(min(max(2 * vmem_est, 32 * 1024 * 1024), 64 * 1024 * 1024))

    kernel = functools.partial(_rnn_kernel, block_t=block_t, nonlinearity=nonlinearity)

    out_p, hT_p = pl.pallas_call(
        kernel,
        out_shape=(
            jax.ShapeDtypeStruct((T, Bp, Hp), x.dtype),
            jax.ShapeDtypeStruct((Bp, Hp), x.dtype),
        ),
        grid_spec=pltpu.PrefetchScalarGridSpec(
            num_scalar_prefetch=0,
            grid=(nb, nt),
            in_specs=[
                pl.BlockSpec((block_t, block_b, Hp), lambda b, t: (t, b, 0)),  # xw chunk
                pl.BlockSpec((block_b, Hp), lambda b, t: (b, 0)),              # h0 block
                pl.BlockSpec(memory_space=pl.ANY),                             # Wh.T (HBM)
            ],
            out_specs=[
                pl.BlockSpec((block_t, block_b, Hp), lambda b, t: (t, b, 0)),  # outputs
                pl.BlockSpec((block_b, Hp), lambda b, t: (b, 0)),              # final hidden
            ],
            scratch_shapes=[
                pltpu.VMEM((Hp, Hp), whT_p.dtype),       # single-buffered Wh.T
                pltpu.VMEM((block_b, Hp), jnp.float32),  # carried hidden state (f32)
            ],
        ),
        compiler_params=pltpu.CompilerParams(
            dimension_semantics=("parallel", "arbitrary"),   # batch parallel, time sequential
            vmem_limit_bytes=vmem_limit,
        ),
    )(xw_p, h0_p, whT_p)

    # Strip padding; kernel output is time-major (full-tile stores) -> back to (B, T, H).
    out = jnp.transpose(out_p[:, :B, :H], (1, 0, 2))
    return out, hT_p[:B, :H]


def vanilla_rnn_ref(x, h0, wx, wh, bx, bh, *, nonlinearity="tanh"):
    """Pure-JAX reference mirroring the PyTorch forward."""
    B, T, I = x.shape
    h = h0
    outs = []
    for t in range(T):
        pre = x[:, t, :] @ wx.T + bx + h @ wh.T + bh
        outs.append(pre[:, None, :])
        h = jnp.tanh(pre) if nonlinearity == "tanh" else jnp.maximum(pre, 0.0)
    return jnp.concatenate(outs, axis=1), h


if __name__ == "__main__":
    # Small shapes consistent with the module's forward: x is (B, T, input_size).
    B, T, input_size, hidden_size = 2, 8, 4, 32
    nonlinearity = "tanh"

    key = jax.random.PRNGKey(0)
    kx, kwx, kwh, kbx, kbh = jax.random.split(key, 5)

    x = jax.random.normal(kx, (B, T, input_size), dtype=jnp.float32)
    h0 = jnp.zeros((B, hidden_size), dtype=jnp.float32)   # default h_0 in the module

    # Deterministic parameter init (nn.Linear-style uniform bound).
    bound_x = 1.0 / (input_size ** 0.5)
    bound_h = 1.0 / (hidden_size ** 0.5)
    wx = jax.random.uniform(kwx, (hidden_size, input_size), jnp.float32, -bound_x, bound_x)
    bx = jax.random.uniform(kbx, (hidden_size,), jnp.float32, -bound_x, bound_x)
    wh = jax.random.uniform(kwh, (hidden_size, hidden_size), jnp.float32, -bound_h, bound_h)
    bh = jax.random.uniform(kbh, (hidden_size,), jnp.float32, -bound_h, bound_h)

    out, h_final = vanilla_rnn_pallas(x, h0, wx, wh, bx, bh, nonlinearity=nonlinearity)
    out = jax.block_until_ready(out)
    h_final = jax.block_until_ready(h_final)

    out_ref, h_ref = vanilla_rnn_ref(x, h0, wx, wh, bx, bh, nonlinearity=nonlinearity)
    assert out.shape == (B, T, hidden_size)
    assert h_final.shape == (B, hidden_size)
    assert jnp.allclose(out, out_ref, atol=1e-4, rtol=1e-4), \
        float(jnp.max(jnp.abs(out - out_ref)))
    assert jnp.allclose(h_final, h_ref, atol=1e-4, rtol=1e-4), \
        float(jnp.max(jnp.abs(h_final - h_ref)))

    print("KERNEL_OK")
</pallas_src>

<mosaic_0001>
module attributes {stable_mosaic.version = 11 : i64} {
  func.func @_rnn_kernel(%arg0: i32, %arg1: i32, %arg2: memref<8x8x128xf32, #tpu.memory_space<vmem>>, %arg3: memref<8x128xf32, #tpu.memory_space<vmem>>, %arg4: memref<128x128xf32, #tpu.memory_space<any>>, %arg5: memref<8x8x128xf32, #tpu.memory_space<vmem>>, %arg6: memref<8x128xf32, #tpu.memory_space<vmem>>, %arg7: memref<128x128xf32, #tpu.memory_space<vmem>>, %arg8: memref<8x128xf32, #tpu.memory_space<vmem>>) attributes {dimension_semantics = [#tpu.dimension_semantics<parallel>, #tpu.dimension_semantics<arbitrary>], iteration_bounds = array<i64: 1, 1>, scalar_prefetch = 0 : i64, scratch_operands = 2 : i64, tpu.core_type = #tpu.core_type<tc>, window_params = [{transform_indices = @transform_0, window_bounds = array<i64: 8, 8, 128>}, {transform_indices = @transform_1, window_bounds = array<i64: 8, 128>}, {}, {transform_indices = @transform_3, window_bounds = array<i64: 8, 8, 128>}, {transform_indices = @transform_4, window_bounds = array<i64: 8, 128>}]} {
    %c0_i32 = arith.constant 0 : i32
    %0 = arith.cmpi eq, %arg1, %c0_i32 : i32
    %1 = arith.extui %0 : i1 to i32
    %c0_i32_0 = arith.constant 0 : i32
    %2 = arith.cmpi ne, %1, %c0_i32_0 : i32
    scf.if %2 {
      "tpu.region"() ({
        %75 = tpu.sem_alloc : memref<!tpu.dma_semaphore, #tpu.memory_space<semaphore_mem>>
        tpu.enqueue_dma source(%arg4 : memref<128x128xf32, #tpu.memory_space<any>>) target(%arg7 : memref<128x128xf32, #tpu.memory_space<vmem>>) target_semaphore(%75 : memref<!tpu.dma_semaphore, #tpu.memory_space<semaphore_mem>>)
        tpu.wait_dma2 semaphore(%75 : memref<!tpu.dma_semaphore, #tpu.memory_space<semaphore_mem>>) src(%arg4 : memref<128x128xf32, #tpu.memory_space<any>>) dst(%arg7 : memref<128x128xf32, #tpu.memory_space<vmem>>)
        tpu.yield
      }) : () -> ()
      %c0_56 = arith.constant 0 : index
      %c0_57 = arith.constant 0 : index
      %73 = vector.load %arg3[%c0_56, %c0_57] : memref<8x128xf32, #tpu.memory_space<vmem>>, vector<8x128xf32>
      %c0_58 = arith.constant 0 : index
      %c0_59 = arith.constant 0 : index
      %74 = vector.load %arg8[%c0_58, %c0_59] : memref<8x128xf32, #tpu.memory_space<vmem>>, vector<8x128xf32>
      tpu.vector_store %arg8[%c0_58, %c0_59], %73 {strides = array<i32>} : memref<8x128xf32, #tpu.memory_space<vmem>>, vector<8x128xf32>,
    } else {
    }
    %c0 = arith.constant 0 : index
    %c0_1 = arith.constant 0 : index
    %3 = vector.load %arg7[%c0, %c0_1] : memref<128x128xf32, #tpu.memory_space<vmem>>, vector<128x128xf32>
    %c0_2 = arith.constant 0 : index
    %c0_3 = arith.constant 0 : index
    %4 = vector.load %arg8[%c0_2, %c0_3] : memref<8x128xf32, #tpu.memory_space<vmem>>, vector<8x128xf32>
    %c0_4 = arith.constant 0 : index
    %c0_5 = arith.constant 0 : index
    %c0_6 = arith.constant 0 : index
    %5 = vector.load %arg2[%c0_4, %c0_5, %c0_6] : memref<8x8x128xf32, #tpu.memory_space<vmem>>, vector<1x8x128xf32>
    %6 = vector.shape_cast %5 : vector<1x8x128xf32> to vector<8x128xf32>
    %cst = arith.constant dense<0.000000e+00> : vector<8x128xf32>
    %7 = tpu.matmul %4, %3, %cst {dimension_numbers = #tpu.dot_dimension_numbers<[1], [0], [0], [1], [0, 0, 1, 1], [], []>} : vector<8x128xf32>, vector<128x128xf32>, vector<8x128xf32> -> vector<8x128xf32>
    %8 = arith.addf %6, %7 : vector<8x128xf32>
    %c0_7 = arith.constant 0 : index
    %c0_8 = arith.constant 0 : index
    %c0_9 = arith.constant 0 : index
    %9 = vector.load %arg5[%c0_7, %c0_8, %c0_9] : memref<8x8x128xf32, #tpu.memory_space<vmem>>, vector<1x8x128xf32>
    %10 = vector.shape_cast %9 : vector<1x8x128xf32> to vector<8x128xf32>
    %11 = vector.shape_cast %8 : vector<8x128xf32> to vector<1x8x128xf32>
    tpu.vector_store %arg5[%c0_7, %c0_8, %c0_9], %11 {strides = array<i32>} : memref<8x8x128xf32, #tpu.memory_space<vmem>>, vector<1x8x128xf32>,
    %12 = math.tanh %8 : vector<8x128xf32>
    %c1 = arith.constant 1 : index
    %c0_10 = arith.constant 0 : index
    %c0_11 = arith.constant 0 : index
    %13 = vector.load %arg2[%c1, %c0_10, %c0_11] : memref<8x8x128xf32, #tpu.memory_space<vmem>>, vector<1x8x128xf32>
    %14 = vector.shape_cast %13 : vector<1x8x128xf32> to vector<8x128xf32>
    %cst_12 = arith.constant dense<0.000000e+00> : vector<8x128xf32>
    %15 = tpu.matmul %12, %3, %cst_12 {dimension_numbers = #tpu.dot_dimension_numbers<[1], [0], [0], [1], [0, 0, 1, 1], [], []>} : vector<8x128xf32>, vector<128x128xf32>, vector<8x128xf32> -> vector<8x128xf32>
    %16 = arith.addf %14, %15 : vector<8x128xf32>
    %c1_13 = arith.constant 1 : index
    %c0_14 = arith.constant 0 : index
    %c0_15 = arith.constant 0 : index
    %17 = vector.load %arg5[%c1_13, %c0_14, %c0_15] : memref<8x8x128xf32, #tpu.memory_space<vmem>>, vector<1x8x128xf32>
    %18 = vector.shape_cast %17 : vector<1x8x128xf32> to vector<8x128xf32>
    %19 = vector.shape_cast %16 : vector<8x128xf32> to vector<1x8x128xf32>
    tpu.vector_store %arg5[%c1_13, %c0_14, %c0_15], %19 {strides = array<i32>} : memref<8x8x128xf32, #tpu.memory_space<vmem>>, vector<1x8x128xf32>,
    %20 = math.tanh %16 : vector<8x128xf32>
    %c2 = arith.constant 2 : index
    %c0_16 = arith.constant 0 : index
    %c0_17 = arith.constant 0 : index
    %21 = vector.load %arg2[%c2, %c0_16, %c0_17] : memref<8x8x128xf32, #tpu.memory_space<vmem>>, vector<1x8x128xf32>
    %22 = vector.shape_cast %21 : vector<1x8x128xf32> to vector<8x128xf32>
    %cst_18 = arith.constant dense<0.000000e+00> : vector<8x128xf32>
    %23 = tpu.matmul %20, %3, %cst_18 {dimension_numbers = #tpu.dot_dimension_numbers<[1], [0], [0], [1], [0, 0, 1, 1], [], []>} : vector<8x128xf32>, vector<128x128xf32>, vector<8x128xf32> -> vector<8x128xf32>
    %24 = arith.addf %22, %23 : vector<8x128xf32>
    %c2_19 = arith.constant 2 : index
    %c0_20 = arith.constant 0 : index
    %c0_21 = arith.constant 0 : index
    %25 = vector.load %arg5[%c2_19, %c0_20, %c0_21] : memref<8x8x128xf32, #tpu.memory_space<vmem>>, vector<1x8x128xf32>
    %26 = vector.shape_cast %25 : vector<1x8x128xf32> to vector<8x128xf32>
    %27 = vector.shape_cast %24 : vector<8x128xf32> to vector<1x8x128xf32>
    tpu.vector_store %arg5[%c2_19, %c0_20, %c0_21], %27 {strides = array<i32>} : memref<8x8x128xf32, #tpu.memory_space<vmem>>, vector<1x8x128xf32>,
    %28 = math.tanh %24 : vector<8x128xf32>
    %c3 = arith.constant 3 : index
    %c0_22 = arith.constant 0 : index
    %c0_23 = arith.constant 0 : index
    %29 = vector.load %arg2[%c3, %c0_22, %c0_23] : memref<8x8x128xf32, #tpu.memory_space<vmem>>, vector<1x8x128xf32>
    %30 = vector.shape_cast %29 : vector<1x8x128xf32> to vector<8x128xf32>
    %cst_24 = arith.constant dense<0.000000e+00> : vector<8x128xf32>
    %31 = tpu.matmul %28, %3, %cst_24 {dimension_numbers = #tpu.dot_dimension_numbers<[1], [0], [0], [1], [0, 0, 1, 1], [], []>} : vector<8x128xf32>, vector<128x128xf32>, vector<8x128xf32> -> vector<8x128xf32>
    %32 = arith.addf %30, %31 : vector<8x128xf32>
    %c3_25 = arith.constant 3 : index
    %c0_26 = arith.constant 0 : index
    %c0_27 = arith.constant 0 : index
    %33 = vector.load %arg5[%c3_25, %c0_26, %c0_27] : memref<8x8x128xf32, #tpu.memory_space<vmem>>, vector<1x8x128xf32>
    %34 = vector.shape_cast %33 : vector<1x8x128xf32> to vector<8x128xf32>
    %35 = vector.shape_cast %32 : vector<8x128xf32> to vector<1x8x128xf32>
    tpu.vector_store %arg5[%c3_25, %c0_26, %c0_27], %35 {strides = array<i32>} : memref<8x8x128xf32, #tpu.memory_space<vmem>>, vector<1x8x128xf32>,
    %36 = math.tanh %32 : vector<8x128xf32>
    %c4 = arith.constant 4 : index
    %c0_28 = arith.constant 0 : index
    %c0_29 = arith.constant 0 : index
    %37 = vector.load %arg2[%c4, %c0_28, %c0_29] : memref<8x8x128xf32, #tpu.memory_space<vmem>>, vector<1x8x128xf32>
    %38 = vector.shape_cast %37 : vector<1x8x128xf32> to vector<8x128xf32>
    %cst_30 = arith.constant dense<0.000000e+00> : vector<8x128xf32>
    %39 = tpu.matmul %36, %3, %cst_30 {dimension_numbers = #tpu.dot_dimension_numbers<[1], [0], [0], [1], [0, 0, 1, 1], [], []>} : vector<8x128xf32>, vector<128x128xf32>, vector<8x128xf32> -> vector<8x128xf32>
    %40 = arith.addf %38, %39 : vector<8x128xf32>
    %c4_31 = arith.constant 4 : index
    %c0_32 = arith.constant 0 : index
    %c0_33 = arith.constant 0 : index
    %41 = vector.load %arg5[%c4_31, %c0_32, %c0_33] : memref<8x8x128xf32, #tpu.memory_space<vmem>>, vector<1x8x128xf32>
    %42 = vector.shape_cast %41 : vector<1x8x128xf32> to vector<8x128xf32>
    %43 = vector.shape_cast %40 : vector<8x128xf32> to vector<1x8x128xf32>
    tpu.vector_store %arg5[%c4_31, %c0_32, %c0_33], %43 {strides = array<i32>} : memref<8x8x128xf32, #tpu.memory_space<vmem>>, vector<1x8x128xf32>,
    %44 = math.tanh %40 : vector<8x128xf32>
    %c5 = arith.constant 5 : index
    %c0_34 = arith.constant 0 : index
    %c0_35 = arith.constant 0 : index
    %45 = vector.load %arg2[%c5, %c0_34, %c0_35] : memref<8x8x128xf32, #tpu.memory_space<vmem>>, vector<1x8x128xf32>
    %46 = vector.shape_cast %45 : vector<1x8x128xf32> to vector<8x128xf32>
    %cst_36 = arith.constant dense<0.000000e+00> : vector<8x128xf32>
    %47 = tpu.matmul %44, %3, %cst_36 {dimension_numbers = #tpu.dot_dimension_numbers<[1], [0], [0], [1], [0, 0, 1, 1], [], []>} : vector<8x128xf32>, vector<128x128xf32>, vector<8x128xf32> -> vector<8x128xf32>
    %48 = arith.addf %46, %47 : vector<8x128xf32>
    %c5_37 = arith.constant 5 : index
    %c0_38 = arith.constant 0 : index
    %c0_39 = arith.constant 0 : index
    %49 = vector.load %arg5[%c5_37, %c0_38, %c0_39] : memref<8x8x128xf32, #tpu.memory_space<vmem>>, vector<1x8x128xf32>
    %50 = vector.shape_cast %49 : vector<1x8x128xf32> to vector<8x128xf32>
    %51 = vector.shape_cast %48 : vector<8x128xf32> to vector<1x8x128xf32>
    tpu.vector_store %arg5[%c5_37, %c0_38, %c0_39], %51 {strides = array<i32>} : memref<8x8x128xf32, #tpu.memory_space<vmem>>, vector<1x8x128xf32>,
    %52 = math.tanh %48 : vector<8x128xf32>
    %c6 = arith.constant 6 : index
    %c0_40 = arith.constant 0 : index
    %c0_41 = arith.constant 0 : index
    %53 = vector.load %arg2[%c6, %c0_40, %c0_41] : memref<8x8x128xf32, #tpu.memory_space<vmem>>, vector<1x8x128xf32>
    %54 = vector.shape_cast %53 : vector<1x8x128xf32> to vector<8x128xf32>
    %cst_42 = arith.constant dense<0.000000e+00> : vector<8x128xf32>
    %55 = tpu.matmul %52, %3, %cst_42 {dimension_numbers = #tpu.dot_dimension_numbers<[1], [0], [0], [1], [0, 0, 1, 1], [], []>} : vector<8x128xf32>, vector<128x128xf32>, vector<8x128xf32> -> vector<8x128xf32>
    %56 = arith.addf %54, %55 : vector<8x128xf32>
    %c6_43 = arith.constant 6 : index
    %c0_44 = arith.constant 0 : index
    %c0_45 = arith.constant 0 : index
    %57 = vector.load %arg5[%c6_43, %c0_44, %c0_45] : memref<8x8x128xf32, #tpu.memory_space<vmem>>, vector<1x8x128xf32>
    %58 = vector.shape_cast %57 : vector<1x8x128xf32> to vector<8x128xf32>
    %59 = vector.shape_cast %56 : vector<8x128xf32> to vector<1x8x128xf32>
    tpu.vector_store %arg5[%c6_43, %c0_44, %c0_45], %59 {strides = array<i32>} : memref<8x8x128xf32, #tpu.memory_space<vmem>>, vector<1x8x128xf32>,
    %60 = math.tanh %56 : vector<8x128xf32>
    %c7 = arith.constant 7 : index
    %c0_46 = arith.constant 0 : index
    %c0_47 = arith.constant 0 : index
    %61 = vector.load %arg2[%c7, %c0_46, %c0_47] : memref<8x8x128xf32, #tpu.memory_space<vmem>>, vector<1x8x128xf32>
    %62 = vector.shape_cast %61 : vector<1x8x128xf32> to vector<8x128xf32>
    %cst_48 = arith.constant dense<0.000000e+00> : vector<8x128xf32>
    %63 = tpu.matmul %60, %3, %cst_48 {dimension_numbers = #tpu.dot_dimension_numbers<[1], [0], [0], [1], [0, 0, 1, 1], [], []>} : vector<8x128xf32>, vector<128x128xf32>, vector<8x128xf32> -> vector<8x128xf32>
    %64 = arith.addf %62, %63 : vector<8x128xf32>
    %c7_49 = arith.constant 7 : index
    %c0_50 = arith.constant 0 : index
    %c0_51 = arith.constant 0 : index
    %65 = vector.load %arg5[%c7_49, %c0_50, %c0_51] : memref<8x8x128xf32, #tpu.memory_space<vmem>>, vector<1x8x128xf32>
    %66 = vector.shape_cast %65 : vector<1x8x128xf32> to vector<8x128xf32>
    %67 = vector.shape_cast %64 : vector<8x128xf32> to vector<1x8x128xf32>
    tpu.vector_store %arg5[%c7_49, %c0_50, %c0_51], %67 {strides = array<i32>} : memref<8x8x128xf32, #tpu.memory_space<vmem>>, vector<1x8x128xf32>,
    %68 = math.tanh %64 : vector<8x128xf32>
    %c0_52 = arith.constant 0 : index
    %c0_53 = arith.constant 0 : index
    %69 = vector.load %arg8[%c0_52, %c0_53] : memref<8x128xf32, #tpu.memory_space<vmem>>, vector<8x128xf32>
    tpu.vector_store %arg8[%c0_52, %c0_53], %68 {strides = array<i32>} : memref<8x128xf32, #tpu.memory_space<vmem>>, vector<8x128xf32>,
    %c0_i32_54 = arith.constant 0 : i32
    %70 = arith.cmpi eq, %arg1, %c0_i32_54 : i32
    %71 = arith.extui %70 : i1 to i32
    %c0_i32_55 = arith.constant 0 : i32
    %72 = arith.cmpi ne, %71, %c0_i32_55 : i32
    scf.if %72 {
      %c0_56 = arith.constant 0 : index
      %c0_57 = arith.constant 0 : index
      %73 = vector.load %arg6[%c0_56, %c0_57] : memref<8x128xf32, #tpu.memory_space<vmem>>, vector<8x128xf32>
      tpu.vector_store %arg6[%c0_56, %c0_57], %68 {strides = array<i32>} : memref<8x128xf32, #tpu.memory_space<vmem>>, vector<8x128xf32>,
    } else {
    }
    return
  }
  func.func @transform_0(%arg0: i32, %arg1: i32) -> (i32, i32, i32) {
    %c0_i32 = arith.constant 0 : i32
    %c0_i32_0 = arith.constant 0 : i32
    return %arg1, %arg0, %c0_i32 : i32, i32, i32
  }
  func.func @transform_1(%arg0: i32, %arg1: i32) -> (i32, i32) {
    %c0_i32 = arith.constant 0 : i32
    %c0_i32_0 = arith.constant 0 : i32
    return %arg0, %c0_i32 : i32, i32
  }
  func.func @transform_3(%arg0: i32, %arg1: i32) -> (i32, i32, i32) {
    %c0_i32 = arith.constant 0 : i32
    %c0_i32_0 = arith.constant 0 : i32
    return %arg1, %arg0, %c0_i32 : i32, i32, i32
  }
  func.func @transform_4(%arg0: i32, %arg1: i32) -> (i32, i32) {
    %c0_i32 = arith.constant 0 : i32
    %c0_i32_0 = arith.constant 0 : i32
    return %arg0, %c0_i32 : i32, i32
  }
}

</mosaic_0001>

<llo_original>
// kernel: tpu_custom_call.1
$region0: #{tpu_custom_call.1}
  #allocation0 [shape = 'u32[]', space=smem, size = 0x4, offset = 0x4, fixed_abs, tag = 'smem constant byte address 0x4 - core index']
  #allocation1 [shape = 'u32[144,128]{1,0:T(1,128)}', space=vmem, size = 0x12000, scoped, tag = 'internal scratch']
  #allocation2 [shape = 'f32[128,128]{1,0:T(8,128)}', space=vmem, size = 0x10000, scoped, tag = 'scratch operand']
  #allocation3 [shape = 'f32[8,128]{1,0:T(8,128)}', space=vmem, size = 0x1000, scoped, tag = 'scratch operand']
  #allocation13 [shape = 's32[]', space=sflag, size = 0x4, offset = 0, fixed_abs, tag = 'sflag constant byte address 0x0 - dummy sync flag']
  #allocation14 [shape = 's32[]', space=sflag, size = 0x4, offset = 0, fixed_abs, tag = 'sflag constant byte address 0x0 - dummy sync flag']
  #allocation15 [shape = 'u32[]', space=smem, size = 0x4, offset = 0x44, fixed_abs, tag = 'smem constant byte address 0x44 - assertion arg 0']
  #allocation16 [shape = 'u32[]', space=smem, size = 0x4, offset = 0x48, fixed_abs, tag = 'smem constant byte address 0x48 - assertion arg 1']
  %s0 = inlined_call_operand.hbm [shape: f32[8,8,128], index: 0, kind: input, shape index: {}]
  %s1 = inlined_call_operand.hbm [shape: f32[8,128], index: 1, kind: input, shape index: {}]
  %s2 = inlined_call_operand.hbm [shape: f32[128,128], index: 2, kind: input, shape index: {}]
  %s3 = inlined_call_operand.hbm [shape: f32[8,8,128], index: 3, kind: output, shape index: {0}]
  %s4 = inlined_call_operand.hbm [shape: f32[8,128], index: 4, kind: output, shape index: {1}]
  %5 = xla_tuple %s3, %s4
  %s6 = sld [smem:[#allocation0]]
  $region47: #{tpu_custom_call.1} parent=0
    _
  %s8 = ssub.s32 1, %s6
  %s9 = scalar_select 0, %s8, %s6
  $region1: #{tpu_custom_call.1} parent=0
    #allocation4 [shape = 'u8[32768]{0}', space=vmem, size = 0x8000, scoped, tag = 'input window, operand 0, single buffered']
    #allocation5 [shape = 's32[1]{0}', space=sflag, size = 0x4, scoped, tag = 'scoped memory for tpu_custom_call.1']
    #allocation6 [shape = 's32[1]{0}', space=sflag, size = 0x4, scoped, tag = 'scoped memory for tpu_custom_call.1']
    #allocation7 [shape = 'u8[4096]{0}', space=vmem, size = 0x1000, scoped, tag = 'input window, operand 1, single buffered']
    #allocation8 [shape = 's32[1]{0}', space=sflag, size = 0x4, scoped, tag = 'scoped memory for tpu_custom_call.1']
    #allocation9 [shape = 'u8[32768]{0}', space=vmem, size = 0x8000, scoped, tag = 'output window, operand 0, single buffered']
    #allocation10 [shape = 'u8[4096]{0}', space=vmem, size = 0x1000, scoped, tag = 'output window, operand 1, single buffered']
    #allocation11 [shape = 's32[1]{0}', space=sflag, size = 0x4, scoped, tag = 'scoped memory for tpu_custom_call.1']
    %10 = vsyncpa [#allocation5], 0
    %11 = vsyncpa [#allocation8], 0
    %12 = vsyncpa [#allocation6], 0
    %13 = vsyncpa [#allocation11], 0
    // Predicated region
    $region2: #{tpu_custom_call.1} parent=1 // pred_check
      _
    $region3: #{tpu_custom_call.1} parent=1 // pred_check_branch
      %15 = sbr.rel (0) target = $region5
    $region4: #{tpu_custom_call.1} parent=1 // pred_region
      %s17 = ssub.s32 1024, 1024
      %18 = vsyncadd [#allocation5], %s17
      %s19 = sshll.u32 [#allocation4], 4
      %s20 = int_to_ptr.vmem [resolvable:$true] %s19
      %25 = dma.hbm_to_vmem [thread:$0]  %s0, 1024, %s20, [#allocation5], 128, 128, 8
    $region5: #{tpu_custom_call.1} parent=1 // pred_fallthru
      _
    // Predicated region
    $region6: #{tpu_custom_call.1} parent=1 // pred_check
      _
    $region7: #{tpu_custom_call.1} parent=1 // pred_check_branch
      %27 = sbr.rel (0) target = $region9
    $region8: #{tpu_custom_call.1} parent=1 // pred_region
      %s29 = ssub.s32 128, 128
      %30 = vsyncadd [#allocation8], %s29
      %s32 = sshll.u32 [#allocation7], 4
      %s33 = int_to_ptr.vmem [resolvable:$true] %s32
      %35 = dma.hbm_to_vmem [thread:$0]  %s1, 128, %s33, [#allocation8]
    $region9: #{tpu_custom_call.1} parent=1 // pred_fallthru
      _
    // Predicated region
    $region10: #{tpu_custom_call.1} parent=1 // pred_check
      _
    $region11: #{tpu_custom_call.1} parent=1 // pred_check_branch
      %37 = sbr.rel (0) target = $region13
    $region12: #{tpu_custom_call.1} parent=1 // pred_region
      %38 = dma.done [#allocation5], 1024
    $region13: #{tpu_custom_call.1} parent=1 // pred_fallthru
      _
    // Predicated region
    $region14: #{tpu_custom_call.1} parent=1 // pred_check
      _
    $region15: #{tpu_custom_call.1} parent=1 // pred_check_branch
      %40 = sbr.rel (0) target = $region17
    $region16: #{tpu_custom_call.1} parent=1 // pred_region
      %41 = dma.done [#allocation8], 128
    $region17: #{tpu_custom_call.1} parent=1 // pred_fallthru
      _
    %p42 = scmp.eq.s32.totalorder 0, 0
    // Predicated region
    $region18: #{tpu_custom_call.1} parent=1 // pred_check
      %p43 = pneg %p42
    $region19: #{tpu_custom_call.1} parent=1 // pred_check_branch
      %45 = sbr.rel (%p43) target = $region21
    $region20: #{tpu_custom_call.1} parent=1 // pred_region
      $region22: #{tpu_custom_call.1} parent=20
        #allocation12 [shape = 's32[1]{0}', space=sflag, size = 0x4, scoped, tag = 'scoped memory for tpu_custom_call.1']
        // Predicated region
        $region23: #{tpu_custom_call.1} parent=22 // pred_check
          _
        $region24: #{tpu_custom_call.1} parent=22 // pred_check_branch
          %47 = sbr.rel target = $region26
        $region25: #{tpu_custom_call.1} parent=22 // pred_region
          %48 = sst [smem:[#allocation15]] [#allocation14]
          %49 = sst [smem:[#allocation16]] [#allocation13]
        $region26: #{tpu_custom_call.1} parent=22 // pred_fallthru
          _
        %51 = shalt.err (0)
        %s53 = sshll.u32 [#allocation2], 4
        %s54 = int_to_ptr.vmem [resolvable:$true] %s53
        %56 = dma.hbm_to_vmem [thread:$0]  %s2, 2048, %s54, [#allocation12]
        %s57 = smul.u32 128, 1
        %s58 = sshll.u32 %s57, 4
        %59 = dma.done [#allocation12], %s58
      %v60 = vld [vmem:[#allocation7] sm:$0xff]
      %61 = vst [vmem:[#allocation3] sm:$0xff] %v60
    $region21: #{tpu_custom_call.1} parent=1 // pred_fallthru
      _
    %v62 = vld [vmem:[#allocation2] sm:$0xff]
    %v63 = vld [vmem:[#allocation2 + $0x8] sm:$0xff]
    %v64 = vld [vmem:[#allocation2 + $0x10] sm:$0xff]
    %v65 = vld [vmem:[#allocation2 + $0x18] sm:$0xff]
    %v66 = vld [vmem:[#allocation2 + $0x20] sm:$0xff]
    %v67 = vld [vmem:[#allocation2 + $0x28] sm:$0xff]
    %v68 = vld [vmem:[#allocation2 + $0x30] sm:$0xff]
    %v69 = vld [vmem:[#allocation2 + $0x38] sm:$0xff]
    %v70 = vld [vmem:[#allocation2 + $0x40] sm:$0xff]
    %v71 = vld [vmem:[#allocation2 + $0x48] sm:$0xff]
    %v72 = vld [vmem:[#allocation2 + $0x50] sm:$0xff]
    %v73 = vld [vmem:[#allocation2 + $0x58] sm:$0xff]
    %v74 = vld [vmem:[#allocation2 + $0x60] sm:$0xff]
    %v75 = vld [vmem:[#allocation2 + $0x68] sm:$0xff]
    %v76 = vld [vmem:[#allocation2 + $0x70] sm:$0xff]
    %v77 = vld [vmem:[#allocation2 + $0x78] sm:$0xff]
    %v78 = vld [vmem:[#allocation3] sm:$0xff]
    %v79 = vld [vmem:[#allocation4] sm:$0xff]
    %80 = vmatprep.subr.mxu0 0.0
    %81 = vmatpush1.msra.mxu0 %v62
    %82 = vmatprep.subr.mxu0 0.0
    %83 = vmatpush1.msra.mxu0 %v63
    %84 = vmatprep.subr.mxu0 0.0
    %85 = vmatpush1.msra.mxu0 %v64
    %86 = vmatprep.subr.mxu0 0.0
    %87 = vmatpush1.msra.mxu0 %v65
    %88 = vmatprep.subr.mxu0 0.0
    %89 = vmatpush1.msra.mxu0 %v66
    %90 = vmatprep.subr.mxu0 0.0
    %91 = vmatpush1.msra.mxu0 %v67
    %92 = vmatprep.subr.mxu0 0.0
    %93 = vmatpush1.msra.mxu0 %v68
    %94 = vmatprep.subr.mxu0 0.0
    %95 = vmatpush1.msra.mxu0 %v69
    %96 = vmatprep.subr.mxu0 0.0
    %97 = vmatpush1.msra.mxu0 %v70
    %98 = vmatprep.subr.mxu0 0.0
    %99 = vmatpush1.msra.mxu0 %v71
    %100 = vmatprep.subr.mxu0 0.0
    %101 = vmatpush1.msra.mxu0 %v72
    %102 = vmatprep.subr.mxu0 0.0
    %103 = vmatpush1.msra.mxu0 %v73
    %104 = vmatprep.subr.mxu0 0.0
    %105 = vmatpush1.msra.mxu0 %v74
    %106 = vmatprep.subr.mxu0 0.0
    %107 = vmatpush1.msra.mxu0 %v75
    %108 = vmatprep.subr.mxu0 0.0
    %109 = vmatpush1.msra.mxu0 %v76
    %110 = vmatprep.subr.mxu0 0.0
    %111 = vmatpush1.msra.mxu0 %v77
    %112 = vmatprep.subr.mxu0 0.0
    %113 = vmatpush1.msra.mxu0 0.0
    %114 = vmatprep.subr.mxu0 0.0
    %115 = vmatpush1.msra.mxu0 0.0
    %116 = vmatprep.subr.mxu0 0.0
    %117 = vmatpush1.msra.mxu0 0.0
    %118 = vmatprep.subr.mxu0 0.0
    %119 = vmatpush1.msra.mxu0 0.0
    %120 = vmatprep.subr.mxu0 0.0
    %121 = vmatpush1.msra.mxu0 0.0
    %122 = vmatprep.subr.mxu0 0.0
    %123 = vmatpush1.msra.mxu0 0.0
    %124 = vmatprep.subr.mxu0 0.0
    %125 = vmatpush1.msra.mxu0 0.0
    %126 = vmatprep.subr.mxu0 0.0
    %127 = vmatpush1.msra.mxu0 0.0
    %128 = vmatprep.subr.mxu0 0.0
    %129 = vmatpush1.msra.mxu0 0.0
    %130 = vmatprep.subr.mxu0 0.0
    %131 = vmatpush1.msra.mxu0 0.0
    %132 = vmatprep.subr.mxu0 0.0
    %133 = vmatpush1.msra.mxu0 0.0
    %134 = vmatprep.subr.mxu0 0.0
    %135 = vmatpush1.msra.mxu0 0.0
    %136 = vmatprep.subr.mxu0 0.0
    %137 = vmatpush1.msra.mxu0 0.0
    %138 = vmatprep.subr.mxu0 0.0
    %139 = vmatpush1.msra.mxu0 0.0
    %140 = vmatprep.subr.mxu0 0.0
    %141 = vmatpush1.msra.mxu0 0.0
    %142 = vmatprep.subr.mxu0 0.0
    %143 = vmatpush1.msra.mxu0 0.0
    %144 = vmatprep.mubr.f32.mxu0 0.0
    %145 = vmatmul.mubr.f32.gmra.mrb[0].mxu0 %v78
    %v146 = vpop.f32.mrb[0].mxu0
    %v147 = vadd.f32 0.0, %v146
    %v148 = vpop.f32.mrb[0].mxu0
    %149 = vdwg.mxu0
    %v150 = vadd.f32 %v79, %v147
    %151 = vst [vmem:[#allocation9] sm:$0xff] %v150
    %v152 = vtanh.pop %v150
    %s153 = scalar_lea.vmem [#allocation4], 8
    %v154 = vld [vmem:[%s153] sm:$0xff]
    %155 = vmatprep.subr.mxu0 0.0
    %156 = vmatpush1.msra.mxu0 %v62
    %157 = vmatprep.subr.mxu0 0.0
    %158 = vmatpush1.msra.mxu0 %v63
    %159 = vmatprep.subr.mxu0 0.0
    %160 = vmatpush1.msra.mxu0 %v64
    %161 = vmatprep.subr.mxu0 0.0
    %162 = vmatpush1.msra.mxu0 %v65
    %163 = vmatprep.subr.mxu0 0.0
    %164 = vmatpush1.msra.mxu0 %v66
    %165 = vmatprep.subr.mxu0 0.0
    %166 = vmatpush1.msra.mxu0 %v67
    %167 = vmatprep.subr.mxu0 0.0
    %168 = vmatpush1.msra.mxu0 %v68
    %169 = vmatprep.subr.mxu0 0.0
    %170 = vmatpush1.msra.mxu0 %v69
    %171 = vmatprep.subr.mxu0 0.0
    %172 = vmatpush1.msra.mxu0 %v70
    %173 = vmatprep.subr.mxu0 0.0
    %174 = vmatpush1.msra.mxu0 %v71
    %175 = vmatprep.subr.mxu0 0.0
    %176 = vmatpush1.msra.mxu0 %v72
    %177 = vmatprep.subr.mxu0 0.0
    %178 = vmatpush1.msra.mxu0 %v73
    %179 = vmatprep.subr.mxu0 0.0
    %180 = vmatpush1.msra.mxu0 %v74
    %181 = vmatprep.subr.mxu0 0.0
    %182 = vmatpush1.msra.mxu0 %v75
    %183 = vmatprep.subr.mxu0 0.0
    %184 = vmatpush1.msra.mxu0 %v76
    %185 = vmatprep.subr.mxu0 0.0
    %186 = vmatpush1.msra.mxu0 %v77
    %187 = vmatprep.subr.mxu0 0.0
    %188 = vmatpush1.msra.mxu0 0.0
    %189 = vmatprep.subr.mxu0 0.0
    %190 = vmatpush1.msra.mxu0 0.0
    %191 = vmatprep.subr.mxu0 0.0
    %192 = vmatpush1.msra.mxu0 0.0
    %193 = vmatprep.subr.mxu0 0.0
    %194 = vmatpush1.msra.mxu0 0.0
    %195 = vmatprep.subr.mxu0 0.0
    %196 = vmatpush1.msra.mxu0 0.0
    %197 = vmatprep.subr.mxu0 0.0
    %198 = vmatpush1.msra.mxu0 0.0
    %199 = vmatprep.subr.mxu0 0.0
    %200 = vmatpush1.msra.mxu0 0.0
    %201 = vmatprep.subr.mxu0 0.0
    %202 = vmatpush1.msra.mxu0 0.0
    %203 = vmatprep.subr.mxu0 0.0
    %204 = vmatpush1.msra.mxu0 0.0
    %205 = vmatprep.subr.mxu0 0.0
    %206 = vmatpush1.msra.mxu0 0.0
    %207 = vmatprep.subr.mxu0 0.0
    %208 = vmatpush1.msra.mxu0 0.0
    %209 = vmatprep.subr.mxu0 0.0
    %210 = vmatpush1.msra.mxu0 0.0
    %211 = vmatprep.subr.mxu0 0.0
    %212 = vmatpush1.msra.mxu0 0.0
    %213 = vmatprep.subr.mxu0 0.0
    %214 = vmatpush1.msra.mxu0 0.0
    %215 = vmatprep.subr.mxu0 0.0
    %216 = vmatpush1.msra.mxu0 0.0
    %217 = vmatprep.subr.mxu0 0.0
    %218 = vmatpush1.msra.mxu0 0.0
    %219 = vmatprep.mubr.f32.mxu0 0.0
    %220 = vmatmul.mubr.f32.gmra.mrb[0].mxu0 %v152
    %v221 = vpop.f32.mrb[0].mxu0
    %v222 = vadd.f32 0.0, %v221
    %v223 = vpop.f32.mrb[0].mxu0
    %224 = vdwg.mxu0
    %v225 = vadd.f32 %v154, %v222
    %s226 = scalar_lea.vmem [#allocation9], 8
    %227 = vst [vmem:[%s226] sm:$0xff] %v225
    %v228 = vtanh.pop %v225
    %s229 = scalar_lea.vmem [#allocation4], 16
    %v230 = vld [vmem:[%s229] sm:$0xff]
    %231 = vmatprep.subr.mxu0 0.0
    %232 = vmatpush1.msra.mxu0 %v62
    %233 = vmatprep.subr.mxu0 0.0
    %234 = vmatpush1.msra.mxu0 %v63
    %235 = vmatprep.subr.mxu0 0.0
    %236 = vmatpush1.msra.mxu0 %v64
    %237 = vmatprep.subr.mxu0 0.0
    %238 = vmatpush1.msra.mxu0 %v65
    %239 = vmatprep.subr.mxu0 0.0
    %240 = vmatpush1.msra.mxu0 %v66
    %241 = vmatprep.subr.mxu0 0.0
    %242 = vmatpush1.msra.mxu0 %v67
    %243 = vmatprep.subr.mxu0 0.0
    %244 = vmatpush1.msra.mxu0 %v68
    %245 = vmatprep.subr.mxu0 0.0
    %246 = vmatpush1.msra.mxu0 %v69
    %247 = vmatprep.subr.mxu0 0.0
    %248 = vmatpush1.msra.mxu0 %v70
    %249 = vmatprep.subr.mxu0 0.0
    %250 = vmatpush1.msra.mxu0 %v71
    %251 = vmatprep.subr.mxu0 0.0
    %252 = vmatpush1.msra.mxu0 %v72
    %253 = vmatprep.subr.mxu0 0.0
    %254 = vmatpush1.msra.mxu0 %v73
    %255 = vmatprep.subr.mxu0 0.0
    %256 = vmatpush1.msra.mxu0 %v74
    %257 = vmatprep.subr.mxu0 0.0
    %258 = vmatpush1.msra.mxu0 %v75
    %259 = vmatprep.subr.mxu0 0.0
    %260 = vmatpush1.msra.mxu0 %v76
    %261 = vmatprep.subr.mxu0 0.0
    %262 = vmatpush1.msra.mxu0 %v77
    %263 = vmatprep.subr.mxu0 0.0
    %264 = vmatpush1.msra.mxu0 0.0
    %265 = vmatprep.subr.mxu0 0.0
    %266 = vmatpush1.msra.mxu0 0.0
    %267 = vmatprep.subr.mxu0 0.0
    %268 = vmatpush1.msra.mxu0 0.0
    %269 = vmatprep.subr.mxu0 0.0
    %270 = vmatpush1.msra.mxu0 0.0
    %271 = vmatprep.subr.mxu0 0.0
    %272 = vmatpush1.msra.mxu0 0.0
    %273 = vmatprep.subr.mxu0 0.0
    %274 = vmatpush1.msra.mxu0 0.0
    %275 = vmatprep.subr.mxu0 0.0
    %276 = vmatpush1.msra.mxu0 0.0
    %277 = vmatprep.subr.mxu0 0.0
    %278 = vmatpush1.msra.mxu0 0.0
    %279 = vmatprep.subr.mxu0 0.0
    %280 = vmatpush1.msra.mxu0 0.0
    %281 = vmatprep.subr.mxu0 0.0
    %282 = vmatpush1.msra.mxu0 0.0
    %283 = vmatprep.subr.mxu0 0.0
    %284 = vmatpush1.msra.mxu0 0.0
    %285 = vmatprep.subr.mxu0 0.0
    %286 = vmatpush1.msra.mxu0 0.0
    %287 = vmatprep.subr.mxu0 0.0
    %288 = vmatpush1.msra.mxu0 0.0
    %289 = vmatprep.subr.mxu0 0.0
    %290 = vmatpush1.msra.mxu0 0.0
    %291 = vmatprep.subr.mxu0 0.0
    %292 = vmatpush1.msra.mxu0 0.0
    %293 = vmatprep.subr.mxu0 0.0
    %294 = vmatpush1.msra.mxu0 0.0
    %295 = vmatprep.mubr.f32.mxu0 0.0
    %296 = vmatmul.mubr.f32.gmra.mrb[0].mxu0 %v228
    %v297 = vpop.f32.mrb[0].mxu0
    %v298 = vadd.f32 0.0, %v297
    %v299 = vpop.f32.mrb[0].mxu0
    %300 = vdwg.mxu0
    %v301 = vadd.f32 %v230, %v298
    %s302 = scalar_lea.vmem [#allocation9], 16
    %303 = vst [vmem:[%s302] sm:$0xff] %v301
    %v304 = vtanh.pop %v301
    %s305 = scalar_lea.vmem [#allocation4], 24
    %v306 = vld [vmem:[%s305] sm:$0xff]
    %307 = vmatprep.subr.mxu0 0.0
    %308 = vmatpush1.msra.mxu0 %v62
    %309 = vmatprep.subr.mxu0 0.0
    %310 = vmatpush1.msra.mxu0 %v63
    %311 = vmatprep.subr.mxu0 0.0
    %312 = vmatpush1.msra.mxu0 %v64
    %313 = vmatprep.subr.mxu0 0.0
    %314 = vmatpush1.msra.mxu0 %v65
    %315 = vmatprep.subr.mxu0 0.0
    %316 = vmatpush1.msra.mxu0 %v66
    %317 = vmatprep.subr.mxu0 0.0
    %318 = vmatpush1.msra.mxu0 %v67
    %319 = vmatprep.subr.mxu0 0.0
    %320 = vmatpush1.msra.mxu0 %v68
    %321 = vmatprep.subr.mxu0 0.0
    %322 = vmatpush1.msra.mxu0 %v69
    %323 = vmatprep.subr.mxu0 0.0
    %324 = vmatpush1.msra.mxu0 %v70
    %325 = vmatprep.subr.mxu0 0.0
    %326 = vmatpush1.msra.mxu0 %v71
    %327 = vmatprep.subr.mxu0 0.0
    %328 = vmatpush1.msra.mxu0 %v72
    %329 = vmatprep.subr.mxu0 0.0
    %330 = vmatpush1.msra.mxu0 %v73
    %331 = vmatprep.subr.mxu0 0.0
    %332 = vmatpush1.msra.mxu0 %v74
    %333 = vmatprep.subr.mxu0 0.0
    %334 = vmatpush1.msra.mxu0 %v75
    %335 = vmatprep.subr.mxu0 0.0
    %336 = vmatpush1.msra.mxu0 %v76
    %337 = vmatprep.subr.mxu0 0.0
    %338 = vmatpush1.msra.mxu0 %v77
    %339 = vmatprep.subr.mxu0 0.0
    %340 = vmatpush1.msra.mxu0 0.0
    %341 = vmatprep.subr.mxu0 0.0
    %342 = vmatpush1.msra.mxu0 0.0
    %343 = vmatprep.subr.mxu0 0.0
    %344 = vmatpush1.msra.mxu0 0.0
    %345 = vmatprep.subr.mxu0 0.0
    %346 = vmatpush1.msra.mxu0 0.0
    %347 = vmatprep.subr.mxu0 0.0
    %348 = vmatpush1.msra.mxu0 0.0
    %349 = vmatprep.subr.mxu0 0.0
    %350 = vmatpush1.msra.mxu0 0.0
    %351 = vmatprep.subr.mxu0 0.0
    %352 = vmatpush1.msra.mxu0 0.0
    %353 = vmatprep.subr.mxu0 0.0
    %354 = vmatpush1.msra.mxu0 0.0
    %355 = vmatprep.subr.mxu0 0.0
    %356 = vmatpush1.msra.mxu0 0.0
    %357 = vmatprep.subr.mxu0 0.0
    %358 = vmatpush1.msra.mxu0 0.0
    %359 = vmatprep.subr.mxu0 0.0
    %360 = vmatpush1.msra.mxu0 0.0
    %361 = vmatprep.subr.mxu0 0.0
    %362 = vmatpush1.msra.mxu0 0.0
    %363 = vmatprep.subr.mxu0 0.0
    %364 = vmatpush1.msra.mxu0 0.0
    %365 = vmatprep.subr.mxu0 0.0
    %366 = vmatpush1.msra.mxu0 0.0
    %367 = vmatprep.subr.mxu0 0.0
    %368 = vmatpush1.msra.mxu0 0.0
    %369 = vmatprep.subr.mxu0 0.0
    %370 = vmatpush1.msra.mxu0 0.0
    %371 = vmatprep.mubr.f32.mxu0 0.0
    %372 = vmatmul.mubr.f32.gmra.mrb[0].mxu0 %v304
    %v373 = vpop.f32.mrb[0].mxu0
    %v374 = vadd.f32 0.0, %v373
    %v375 = vpop.f32.mrb[0].mxu0
    %376 = vdwg.mxu0
    %v377 = vadd.f32 %v306, %v374
    %s378 = scalar_lea.vmem [#allocation9], 24
    %379 = vst [vmem:[%s378] sm:$0xff] %v377
    %v380 = vtanh.pop %v377
    %s381 = scalar_lea.vmem [#allocation4], 32
    %v382 = vld [vmem:[%s381] sm:$0xff]
    %383 = vmatprep.subr.mxu0 0.0
    %384 = vmatpush1.msra.mxu0 %v62
    %385 = vmatprep.subr.mxu0 0.0
    %386 = vmatpush1.msra.mxu0 %v63
    %387 = vmatprep.subr.mxu0 0.0
    %388 = vmatpush1.msra.mxu0 %v64
    %389 = vmatprep.subr.mxu0 0.0
    %390 = vmatpush1.msra.mxu0 %v65
    %391 = vmatprep.subr.mxu0 0.0
    %392 = vmatpush1.msra.mxu0 %v66
    %393 = vmatprep.subr.mxu0 0.0
    %394 = vmatpush1.msra.mxu0 %v67
    %395 = vmatprep.subr.mxu0 0.0
    %396 = vmatpush1.msra.mxu0 %v68
    %397 = vmatprep.subr.mxu0 0.0
    %398 = vmatpush1.msra.mxu0 %v69
    %399 = vmatprep.subr.mxu0 0.0
    %400 = vmatpush1.msra.mxu0 %v70
    %401 = vmatprep.subr.mxu0 0.0
    %402 = vmatpush1.msra.mxu0 %v71
    %403 = vmatprep.subr.mxu0 0.0
    %404 = vmatpush1.msra.mxu0 %v72
    %405 = vmatprep.subr.mxu0 0.0
    %406 = vmatpush1.msra.mxu0 %v73
    %407 = vmatprep.subr.mxu0 0.0
    %408 = vmatpush1.msra.mxu0 %v74
    %409 = vmatprep.subr.mxu0 0.0
    %410 = vmatpush1.msra.mxu0 %v75
    %411 = vmatprep.subr.mxu0 0.0
    %412 = vmatpush1.msra.mxu0 %v76
    %413 = vmatprep.subr.mxu0 0.0
    %414 = vmatpush1.msra.mxu0 %v77
    %415 = vmatprep.subr.mxu0 0.0
    %416 = vmatpush1.msra.mxu0 0.0
    %417 = vmatprep.subr.mxu0 0.0
    %418 = vmatpush1.msra.mxu0 0.0
    %419 = vmatprep.subr.mxu0 0.0
    %420 = vmatpush1.msra.mxu0 0.0
    %421 = vmatprep.subr.mxu0 0.0
    %422 = vmatpush1.msra.mxu0 0.0
    %423 = vmatprep.subr.mxu0 0.0
    %424 = vmatpush1.msra.mxu0 0.0
    %425 = vmatprep.subr.mxu0 0.0
    %426 = vmatpush1.msra.mxu0 0.0
    %427 = vmatprep.subr.mxu0 0.0
    %428 = vmatpush1.msra.mxu0 0.0
    %429 = vmatprep.subr.mxu0 0.0
    %430 = vmatpush1.msra.mxu0 0.0
    %431 = vmatprep.subr.mxu0 0.0
    %432 = vmatpush1.msra.mxu0 0.0
    %433 = vmatprep.subr.mxu0 0.0
    %434 = vmatpush1.msra.mxu0 0.0
    %435 = vmatprep.subr.mxu0 0.0
    %436 = vmatpush1.msra.mxu0 0.0
    %437 = vmatprep.subr.mxu0 0.0
    %438 = vmatpush1.msra.mxu0 0.0
    %439 = vmatprep.subr.mxu0 0.0
    %440 = vmatpush1.msra.mxu0 0.0
    %441 = vmatprep.subr.mxu0 0.0
    %442 = vmatpush1.msra.mxu0 0.0
    %443 = vmatprep.subr.mxu0 0.0
    %444 = vmatpush1.msra.mxu0 0.0
    %445 = vmatprep.subr.mxu0 0.0
    %446 = vmatpush1.msra.mxu0 0.0
    %447 = vmatprep.mubr.f32.mxu0 0.0
    %448 = vmatmul.mubr.f32.gmra.mrb[0].mxu0 %v380
    %v449 = vpop.f32.mrb[0].mxu0
    %v450 = vadd.f32 0.0, %v449
    %v451 = vpop.f32.mrb[0].mxu0
    %452 = vdwg.mxu0
    %v453 = vadd.f32 %v382, %v450
    %s454 = scalar_lea.vmem [#allocation9], 32
    %455 = vst [vmem:[%s454] sm:$0xff] %v453
    %v456 = vtanh.pop %v453
    %s457 = scalar_lea.vmem [#allocation4], 40
    %v458 = vld [vmem:[%s457] sm:$0xff]
    %459 = vmatprep.subr.mxu0 0.0
    %460 = vmatpush1.msra.mxu0 %v62
    %461 = vmatprep.subr.mxu0 0.0
    %462 = vmatpush1.msra.mxu0 %v63
    %463 = vmatprep.subr.mxu0 0.0
    %464 = vmatpush1.msra.mxu0 %v64
    %465 = vmatprep.subr.mxu0 0.0
    %466 = vmatpush1.msra.mxu0 %v65
    %467 = vmatprep.subr.mxu0 0.0
    %468 = vmatpush1.msra.mxu0 %v66
    %469 = vmatprep.subr.mxu0 0.0
    %470 = vmatpush1.msra.mxu0 %v67
    %471 = vmatprep.subr.mxu0 0.0
    %472 = vmatpush1.msra.mxu0 %v68
    %473 = vmatprep.subr.mxu0 0.0
    %474 = vmatpush1.msra.mxu0 %v69
    %475 = vmatprep.subr.mxu0 0.0
    %476 = vmatpush1.msra.mxu0 %v70
    %477 = vmatprep.subr.mxu0 0.0
    %478 = vmatpush1.msra.mxu0 %v71
    %479 = vmatprep.subr.mxu0 0.0
    %480 = vmatpush1.msra.mxu0 %v72
    %481 = vmatprep.subr.mxu0 0.0
    %482 = vmatpush1.msra.mxu0 %v73
    %483 = vmatprep.subr.mxu0 0.0
    %484 = vmatpush1.msra.mxu0 %v74
    %485 = vmatprep.subr.mxu0 0.0
    %486 = vmatpush1.msra.mxu0 %v75
    %487 = vmatprep.subr.mxu0 0.0
    %488 = vmatpush1.msra.mxu0 %v76
    %489 = vmatprep.subr.mxu0 0.0
    %490 = vmatpush1.msra.mxu0 %v77
    %491 = vmatprep.subr.mxu0 0.0
    %492 = vmatpush1.msra.mxu0 0.0
    %493 = vmatprep.subr.mxu0 0.0
    %494 = vmatpush1.msra.mxu0 0.0
    %495 = vmatprep.subr.mxu0 0.0
    %496 = vmatpush1.msra.mxu0 0.0
    %497 = vmatprep.subr.mxu0 0.0
    %498 = vmatpush1.msra.mxu0 0.0
    %499 = vmatprep.subr.mxu0 0.0
    %500 = vmatpush1.msra.mxu0 0.0
    %501 = vmatprep.subr.mxu0 0.0
    %502 = vmatpush1.msra.mxu0 0.0
    %503 = vmatprep.subr.mxu0 0.0
    %504 = vmatpush1.msra.mxu0 0.0
    %505 = vmatprep.subr.mxu0 0.0
    %506 = vmatpush1.msra.mxu0 0.0
    %507 = vmatprep.subr.mxu0 0.0
    %508 = vmatpush1.msra.mxu0 0.0
    %509 = vmatprep.subr.mxu0 0.0
    %510 = vmatpush1.msra.mxu0 0.0
    %511 = vmatprep.subr.mxu0 0.0
    %512 = vmatpush1.msra.mxu0 0.0
    %513 = vmatprep.subr.mxu0 0.0
    %514 = vmatpush1.msra.mxu0 0.0
    %515 = vmatprep.subr.mxu0 0.0
    %516 = vmatpush1.msra.mxu0 0.0
    %517 = vmatprep.subr.mxu0 0.0
    %518 = vmatpush1.msra.mxu0 0.0
    %519 = vmatprep.subr.mxu0 0.0
    %520 = vmatpush1.msra.mxu0 0.0
    %521 = vmatprep.subr.mxu0 0.0
    %522 = vmatpush1.msra.mxu0 0.0
    %523 = vmatprep.mubr.f32.mxu0 0.0
    %524 = vmatmul.mubr.f32.gmra.mrb[0].mxu0 %v456
    %v525 = vpop.f32.mrb[0].mxu0
    %v526 = vadd.f32 0.0, %v525
    %v527 = vpop.f32.mrb[0].mxu0
    %528 = vdwg.mxu0
    %v529 = vadd.f32 %v458, %v526
    %s530 = scalar_lea.vmem [#allocation9], 40
    %531 = vst [vmem:[%s530] sm:$0xff] %v529
    %v532 = vtanh.pop %v529
    %s533 = scalar_lea.vmem [#allocation4], 48
    %v534 = vld [vmem:[%s533] sm:$0xff]
    %535 = vmatprep.subr.mxu0 0.0
    %536 = vmatpush1.msra.mxu0 %v62
    %537 = vmatprep.subr.mxu0 0.0
    %538 = vmatpush1.msra.mxu0 %v63
    %539 = vmatprep.subr.mxu0 0.0
    %540 = vmatpush1.msra.mxu0 %v64
    %541 = vmatprep.subr.mxu0 0.0
    %542 = vmatpush1.msra.mxu0 %v65
    %543 = vmatprep.subr.mxu0 0.0
    %544 = vmatpush1.msra.mxu0 %v66
    %545 = vmatprep.subr.mxu0 0.0
    %546 = vmatpush1.msra.mxu0 %v67
    %547 = vmatprep.subr.mxu0 0.0
    %548 = vmatpush1.msra.mxu0 %v68
    %549 = vmatprep.subr.mxu0 0.0
    %550 = vmatpush1.msra.mxu0 %v69
    %551 = vmatprep.subr.mxu0 0.0
    %552 = vmatpush1.msra.mxu0 %v70
    %553 = vmatprep.subr.mxu0 0.0
    %554 = vmatpush1.msra.mxu0 %v71
    %555 = vmatprep.subr.mxu0 0.0
    %556 = vmatpush1.msra.mxu0 %v72
    %557 = vmatprep.subr.mxu0 0.0
    %558 = vmatpush1.msra.mxu0 %v73
    %559 = vmatprep.subr.mxu0 0.0
    %560 = vmatpush1.msra.mxu0 %v74
    %561 = vmatprep.subr.mxu0 0.0
    %562 = vmatpush1.msra.mxu0 %v75
    %563 = vmatprep.subr.mxu0 0.0
    %564 = vmatpush1.msra.mxu0 %v76
    %565 = vmatprep.subr.mxu0 0.0
    %566 = vmatpush1.msra.mxu0 %v77
    %567 = vmatprep.subr.mxu0 0.0
    %568 = vmatpush1.msra.mxu0 0.0
    %569 = vmatprep.subr.mxu0 0.0
    %570 = vmatpush1.msra.mxu0 0.0
    %571 = vmatprep.subr.mxu0 0.0
    %572 = vmatpush1.msra.mxu0 0.0
    %573 = vmatprep.subr.mxu0 0.0
    %574 = vmatpush1.msra.mxu0 0.0
    %575 = vmatprep.subr.mxu0 0.0
    %576 = vmatpush1.msra.mxu0 0.0
    %577 = vmatprep.subr.mxu0 0.0
    %578 = vmatpush1.msra.mxu0 0.0
    %579 = vmatprep.subr.mxu0 0.0
    %580 = vmatpush1.msra.mxu0 0.0
    %581 = vmatprep.subr.mxu0 0.0
    %582 = vmatpush1.msra.mxu0 0.0
    %583 = vmatprep.subr.mxu0 0.0
    %584 = vmatpush1.msra.mxu0 0.0
    %585 = vmatprep.subr.mxu0 0.0
    %586 = vmatpush1.msra.mxu0 0.0
    %587 = vmatprep.subr.mxu0 0.0
    %588 = vmatpush1.msra.mxu0 0.0
    %589 = vmatprep.subr.mxu0 0.0
    %590 = vmatpush1.msra.mxu0 0.0
    %591 = vmatprep.subr.mxu0 0.0
    %592 = vmatpush1.msra.mxu0 0.0
    %593 = vmatprep.subr.mxu0 0.0
    %594 = vmatpush1.msra.mxu0 0.0
    %595 = vmatprep.subr.mxu0 0.0
    %596 = vmatpush1.msra.mxu0 0.0
    %597 = vmatprep.subr.mxu0 0.0
    %598 = vmatpush1.msra.mxu0 0.0
    %599 = vmatprep.mubr.f32.mxu0 0.0
    %600 = vmatmul.mubr.f32.gmra.mrb[0].mxu0 %v532
    %v601 = vpop.f32.mrb[0].mxu0
    %v602 = vadd.f32 0.0, %v601
    %v603 = vpop.f32.mrb[0].mxu0
    %604 = vdwg.mxu0
    %v605 = vadd.f32 %v534, %v602
    %s606 = scalar_lea.vmem [#allocation9], 48
    %607 = vst [vmem:[%s606] sm:$0xff] %v605
    %v608 = vtanh.pop %v605
    %s609 = scalar_lea.vmem [#allocation4], 56
    %v610 = vld [vmem:[%s609] sm:$0xff]
    %611 = vmatprep.subr.mxu0 0.0
    %612 = vmatpush1.msra.mxu0 %v62
    %613 = vmatprep.subr.mxu0 0.0
    %614 = vmatpush1.msra.mxu0 %v63
    %615 = vmatprep.subr.mxu0 0.0
    %616 = vmatpush1.msra.mxu0 %v64
    %617 = vmatprep.subr.mxu0 0.0
    %618 = vmatpush1.msra.mxu0 %v65
    %619 = vmatprep.subr.mxu0 0.0
    %620 = vmatpush1.msra.mxu0 %v66
    %621 = vmatprep.subr.mxu0 0.0
    %622 = vmatpush1.msra.mxu0 %v67
    %623 = vmatprep.subr.mxu0 0.0
    %624 = vmatpush1.msra.mxu0 %v68
    %625 = vmatprep.subr.mxu0 0.0
    %626 = vmatpush1.msra.mxu0 %v69
    %627 = vmatprep.subr.mxu0 0.0
    %628 = vmatpush1.msra.mxu0 %v70
    %629 = vmatprep.subr.mxu0 0.0
    %630 = vmatpush1.msra.mxu0 %v71
    %631 = vmatprep.subr.mxu0 0.0
    %632 = vmatpush1.msra.mxu0 %v72
    %633 = vmatprep.subr.mxu0 0.0
    %634 = vmatpush1.msra.mxu0 %v73
    %635 = vmatprep.subr.mxu0 0.0
    %636 = vmatpush1.msra.mxu0 %v74
    %637 = vmatprep.subr.mxu0 0.0
    %638 = vmatpush1.msra.mxu0 %v75
    %639 = vmatprep.subr.mxu0 0.0
    %640 = vmatpush1.msra.mxu0 %v76
    %641 = vmatprep.subr.mxu0 0.0
    %642 = vmatpush1.msra.mxu0 %v77
    %643 = vmatprep.subr.mxu0 0.0
    %644 = vmatpush1.msra.mxu0 0.0
    %645 = vmatprep.subr.mxu0 0.0
    %646 = vmatpush1.msra.mxu0 0.0
    %647 = vmatprep.subr.mxu0 0.0
    %648 = vmatpush1.msra.mxu0 0.0
    %649 = vmatprep.subr.mxu0 0.0
    %650 = vmatpush1.msra.mxu0 0.0
    %651 = vmatprep.subr.mxu0 0.0
    %652 = vmatpush1.msra.mxu0 0.0
    %653 = vmatprep.subr.mxu0 0.0
    %654 = vmatpush1.msra.mxu0 0.0
    %655 = vmatprep.subr.mxu0 0.0
    %656 = vmatpush1.msra.mxu0 0.0
    %657 = vmatprep.subr.mxu0 0.0
    %658 = vmatpush1.msra.mxu0 0.0
    %659 = vmatprep.subr.mxu0 0.0
    %660 = vmatpush1.msra.mxu0 0.0
    %661 = vmatprep.subr.mxu0 0.0
    %662 = vmatpush1.msra.mxu0 0.0
    %663 = vmatprep.subr.mxu0 0.0
    %664 = vmatpush1.msra.mxu0 0.0
    %665 = vmatprep.subr.mxu0 0.0
    %666 = vmatpush1.msra.mxu0 0.0
    %667 = vmatprep.subr.mxu0 0.0
    %668 = vmatpush1.msra.mxu0 0.0
    %669 = vmatprep.subr.mxu0 0.0
    %670 = vmatpush1.msra.mxu0 0.0
    %671 = vmatprep.subr.mxu0 0.0
    %672 = vmatpush1.msra.mxu0 0.0
    %673 = vmatprep.subr.mxu0 0.0
    %674 = vmatpush1.msra.mxu0 0.0
    %675 = vmatprep.mubr.f32.mxu0 0.0
    %676 = vmatmul.mubr.f32.gmra.mrb[0].mxu0 %v608
    %v677 = vpop.f32.mrb[0].mxu0
    %v678 = vadd.f32 0.0, %v677
    %v679 = vpop.f32.mrb[0].mxu0
    %680 = vdwg.mxu0
    %v681 = vadd.f32 %v610, %v678
    %s682 = scalar_lea.vmem [#allocation9], 56
    %683 = vst [vmem:[%s682] sm:$0xff] %v681
    %v684 = vtanh.pop %v681
    %685 = vst [vmem:[#allocation3] sm:$0xff] %v684
    // Predicated region
    $region27: #{tpu_custom_call.1} parent=1 // pred_check
      %p686 = pneg %p42
    $region28: #{tpu_custom_call.1} parent=1 // pred_check_branch
      %688 = sbr.rel (%p686) target = $region30
    $region29: #{tpu_custom_call.1} parent=1 // pred_region
      %689 = vst [vmem:[#allocation10] sm:$0xff] %v684
    $region30: #{tpu_custom_call.1} parent=1 // pred_fallthru
      _
    // Predicated region
    $region31: #{tpu_custom_call.1} parent=1 // pred_check
      _
    $region32: #{tpu_custom_call.1} parent=1 // pred_check_branch
      %691 = sbr.rel (0) target = $region34
    $region33: #{tpu_custom_call.1} parent=1 // pred_region
      %s693 = ssub.s32 1024, 1024
      %694 = vsyncadd [#allocation6], %s693
      %s695 = sshll.u32 [#allocation9], 4
      %s696 = int_to_ptr.vmem [resolvable:$true] %s695
      %701 = dma.vmem_to_hbm [thread:$0]  %s696, 1024, %s3, [#allocation6], 128, 128, 8
    $region34: #{tpu_custom_call.1} parent=1 // pred_fallthru
      _
    // Predicated region
    $region35: #{tpu_custom_call.1} parent=1 // pred_check
      _
    $region36: #{tpu_custom_call.1} parent=1 // pred_check_branch
      %703 = sbr.rel (0) target = $region38
    $region37: #{tpu_custom_call.1} parent=1 // pred_region
      %s705 = ssub.s32 128, 128
      %706 = vsyncadd [#allocation11], %s705
      %s708 = sshll.u32 [#allocation10], 4
      %s709 = int_to_ptr.vmem [resolvable:$true] %s708
      %711 = dma.vmem_to_hbm [thread:$0]  %s709, 128, %s4, [#allocation11]
    $region38: #{tpu_custom_call.1} parent=1 // pred_fallthru
      _
    // Predicated region
    $region39: #{tpu_custom_call.1} parent=1 // pred_check
      _
    $region40: #{tpu_custom_call.1} parent=1 // pred_check_branch
      %713 = sbr.rel (0) target = $region42
    $region41: #{tpu_custom_call.1} parent=1 // pred_region
      %714 = dma.done [#allocation6], 1024
    $region42: #{tpu_custom_call.1} parent=1 // pred_fallthru
      _
    // Predicated region
    $region43: #{tpu_custom_call.1} parent=1 // pred_check
      _
    $region44: #{tpu_custom_call.1} parent=1 // pred_check_branch
      %716 = sbr.rel (0) target = $region46
    $region45: #{tpu_custom_call.1} parent=1 // pred_region
      %717 = dma.done [#allocation11], 128
    $region46: #{tpu_custom_call.1} parent=1 // pred_fallthru
      _
    %718 = vsyncpa [#allocation5], 1
    %719 = vsyncpa [#allocation8], 1
    %720 = vsyncpa [#allocation6], 1
    %721 = vsyncpa [#allocation11], 1

</llo_original>
